<compile_context>
chip_gen: v7x
topology: tpu7x:2x2x1
jax: 0.10.0
libtpu: 0.0.40
codegen_flags: <defaults>
</compile_context>

<pallas_src>
import math

import jax
import jax.numpy as jnp
import numpy as np
from jax.experimental import pallas as pl
from jax.experimental.pallas import tpu as pltpu


# -----------------------------------------------------------------------------
# Kernel body: plain tile copy (works for any rank).
# -----------------------------------------------------------------------------
def _copy_kernel(x_ref, o_ref):
    o_ref[...] = x_ref[...]


# -----------------------------------------------------------------------------
# Generation / dtype helpers (trace-time Python only).
# -----------------------------------------------------------------------------
def _vmem_capacity_bytes() -> int:
    try:
        return int(pltpu.get_tpu_info().vmem_capacity_bytes)
    except Exception:
        return 64 << 20  # v7x-sized default: safe on every generation


def _sublane_quantum(dtype) -> int:
    """Second-minor block quantum: 8 (32-bit), 16 (bf16), 32 (int8/fp8), 64 (4-bit)."""
    d = jnp.dtype(dtype)
    bits = d.itemsize * 8
    if d.name in ("int4", "uint4", "float4_e2m1fn"):
        bits = 4
    return max(8, 256 // bits)


def _pick_lanes(n: int, itemsize: int, tile_bytes: int) -> int:
    """Largest multiple-of-128 divisor of n within the byte budget (0 if none)."""
    if n < 128:
        return 0
    cap = min(n, 8192, max(128, tile_bytes // itemsize))
    if n >= 8 * 128:
        # Prefer >= 8 rows so sublanes are full in the vld/vst path.
        cap = min(cap, max(128, (n // 8) // 128 * 128))
    for lanes in range(cap // 128 * 128, 0, -128):
        if n % lanes == 0:
            return lanes
    return 0


def _pick_row_tile(rows: int, lanes: int, itemsize: int, quantum: int,
                   tile_bytes: int) -> int:
    if rows <= quantum:
        return rows  # full-extent first dim is always a legal block
    tr = max(quantum, (tile_bytes // (lanes * itemsize)) // quantum * quantum)
    # Keep >= 4 grid steps so the "parallel" axis can shard across TensorCores.
    if rows >= 4 * quantum:
        tr = min(tr, max(quantum, (rows // 4) // quantum * quantum))
    return min(tr, max(quantum, rows // quantum * quantum))


# -----------------------------------------------------------------------------
# Pallas copy path (used only when a fresh output buffer is requested).
# -----------------------------------------------------------------------------
def identity_copy_pallas(x: jax.Array) -> jax.Array:
    shape, dtype = x.shape, x.dtype
    n = int(math.prod(shape)) if shape else 1
    if n == 0:
        return x

    d = jnp.dtype(dtype)
    itemsize = d.itemsize
    quantum = _sublane_quantum(dtype)
    vmem_cap = _vmem_capacity_bytes()
    tile_bytes = max(512 * 1024, vmem_cap // 16)  # 4 MiB (v7x) .. 8 MiB (v5e/v6e)
    vmem_limit = vmem_cap // 2                    # working set ~= cap/4 << limit

    lanes = _pick_lanes(n, itemsize, tile_bytes)

    if lanes == 0:
        # n not a multiple of 128 (rare for image tensors): 1-D tiled copy.
        x1 = x.reshape(n)
        blk = max(quantum * 128,
                  (tile_bytes // itemsize) // (quantum * 128) * (quantum * 128))
        if n <= blk:
            out1 = pl.pallas_call(
                _copy_kernel,
                out_shape=jax.ShapeDtypeStruct((n,), dtype),
                compiler_params=pltpu.CompilerParams(vmem_limit_bytes=vmem_limit),
            )(x1)
        else:
            out1 = pl.pallas_call(
                _copy_kernel,
                out_shape=jax.ShapeDtypeStruct((n,), dtype),
                grid=(pl.cdiv(n, blk),),
                in_specs=[pl.BlockSpec((blk,), lambda i: (i,))],
                out_specs=pl.BlockSpec((blk,), lambda i: (i,)),
                compiler_params=pltpu.CompilerParams(
                    dimension_semantics=("parallel",),
                    vmem_limit_bytes=vmem_limit,
                ),
            )(x1)
        return out1.reshape(shape)

    # Lane-dense 2-D path.
    rows = n // lanes
    x2 = x.reshape(rows, lanes)
    tr = _pick_row_tile(rows, lanes, itemsize, quantum, tile_bytes)

    out2 = pl.pallas_call(
        _copy_kernel,
        out_shape=jax.ShapeDtypeStruct((rows, lanes), dtype),
        grid=(pl.cdiv(rows, tr),),
        in_specs=[pl.BlockSpec((tr, lanes), lambda i: (i, 0))],
        out_specs=pl.BlockSpec((tr, lanes), lambda i: (i, 0)),
        compiler_params=pltpu.CompilerParams(
            dimension_semantics=("parallel",),
            vmem_limit_bytes=vmem_limit,
        ),
    )(x2)
    return out2.reshape(shape)


# -----------------------------------------------------------------------------
# Public forward (== BaseFeaturesClass.forward with nn.Identity()).
# -----------------------------------------------------------------------------
def base_features_forward(x: jax.Array, *, materialize: bool = False) -> jax.Array:
    """Identity feature extractor: (B, C, H, W) -> (B, D=C, H, W).

    Default path returns `x` unchanged — the true zero-cost identity (no HBM
    traffic, no defensive copy forced by aliasing).  Pass `materialize=True`
    if a *fresh* output buffer is required; that runs the lane-dense tiled
    Pallas copy kernel.
    """
    if not materialize:
        return x
    return identity_copy_pallas(x)


if __name__ == "__main__":
    key = jax.random.PRNGKey(0)
    B, C, H, W = 2, 4, 16, 16  # small batch of images, per the module docstring
    x = jax.random.normal(key, (B, C, H, W), dtype=jnp.float32)
    x_host = np.asarray(x)

    # Zero-cost default path: identity returns the input unchanged.
    y0 = base_features_forward(x)
    assert y0 is x

    # Pallas copy path: fresh buffer, bitwise identical contents.
    y = jax.block_until_ready(base_features_forward(x, materialize=True))
    assert y.shape == (B, C, H, W), y.shape
    assert y.dtype == x.dtype, y.dtype
    assert np.array_equal(np.asarray(y), x_host), "identity copy kernel mismatch"

    print("KERNEL_OK")
</pallas_src>

<mosaic_0001>
module attributes {stable_mosaic.version = 11 : i64} {
  func.func @_copy_kernel(%arg0: i32, %arg1: memref<8x256xf32, #tpu.memory_space<vmem>>, %arg2: memref<8x256xf32, #tpu.memory_space<vmem>>) attributes {dimension_semantics = [#tpu.dimension_semantics<parallel>], iteration_bounds = array<i64: 1>, scalar_prefetch = 0 : i64, scratch_operands = 0 : i64, tpu.core_type = #tpu.core_type<tc>, window_params = [{transform_indices = @transform_0, window_bounds = array<i64: 8, 256>}, {transform_indices = @transform_1, window_bounds = array<i64: 8, 256>}]} {
    %c0 = arith.constant 0 : index
    %c0_0 = arith.constant 0 : index
    %0 = vector.load %arg1[%c0, %c0_0] : memref<8x256xf32, #tpu.memory_space<vmem>>, vector<8x256xf32>
    %c0_1 = arith.constant 0 : index
    %c0_2 = arith.constant 0 : index
    %1 = vector.load %arg2[%c0_1, %c0_2] : memref<8x256xf32, #tpu.memory_space<vmem>>, vector<8x256xf32>
    tpu.vector_store %arg2[%c0_1, %c0_2], %0 {strides = array<i32>} : memref<8x256xf32, #tpu.memory_space<vmem>>, vector<8x256xf32>,
    return
  }
  func.func @transform_0(%arg0: i32) -> (i32, i32) {
    %c0_i32 = arith.constant 0 : i32
    %c0_i32_0 = arith.constant 0 : i32
    return %arg0, %c0_i32 : i32, i32
  }
  func.func @transform_1(%arg0: i32) -> (i32, i32) {
    %c0_i32 = arith.constant 0 : i32
    %c0_i32_0 = arith.constant 0 : i32
    return %arg0, %c0_i32 : i32, i32
  }
}

</mosaic_0001>

<llo_original>
// kernel: tpu_custom_call.1
$region0: #{tpu_custom_call.1}
  #allocation0 [shape = 'u32[]', space=smem, size = 0x4, offset = 0x4, fixed_abs, tag = 'smem constant byte address 0x4 - core index']
  #allocation1 [shape = 'u32[144,128]{1,0:T(1,128)}', space=vmem, size = 0x12000, scoped, tag = 'internal scratch']
  %s0 = inlined_call_operand.hbm [shape: f32[8,256], index: 0, kind: input, shape index: {}]
  %s1 = inlined_call_operand.hbm [shape: f32[8,256], index: 1, kind: output, shape index: {}]
  %s2 = sld [smem:[#allocation0]]
  $region18: #{tpu_custom_call.1} parent=0
    _
  %s4 = ssub.s32 1, %s2
  %s5 = scalar_select 0, %s4, %s2
  $region1: #{tpu_custom_call.1} parent=0
    #allocation2 [shape = 'u8[8192]{0}', space=vmem, size = 0x2000, scoped, tag = 'input window, operand 0, single buffered']
    #allocation3 [shape = 's32[1]{0}', space=sflag, size = 0x4, scoped, tag = 'scoped memory for tpu_custom_call.1']
    #allocation4 [shape = 's32[1]{0}', space=sflag, size = 0x4, scoped, tag = 'scoped memory for tpu_custom_call.1']
    #allocation5 [shape = 'u8[8192]{0}', space=vmem, size = 0x2000, scoped, tag = 'output window, operand 0, single buffered']
    %6 = vsyncpa [#allocation3], 0
    %7 = vsyncpa [#allocation4], 0
    // Predicated region
    $region2: #{tpu_custom_call.1} parent=1 // pred_check
      _
    $region3: #{tpu_custom_call.1} parent=1 // pred_check_branch
      %9 = sbr.rel (0) target = $region5
    $region4: #{tpu_custom_call.1} parent=1 // pred_region
      %s11 = ssub.s32 256, 256
      %12 = vsyncadd [#allocation3], %s11
      %s14 = sshll.u32 [#allocation2], 4
      %s15 = int_to_ptr.vmem [resolvable:$true] %s14
      %17 = dma.hbm_to_vmem [thread:$0]  %s0, 256, %s15, [#allocation3]
    $region5: #{tpu_custom_call.1} parent=1 // pred_fallthru
      _
    // Predicated region
    $region6: #{tpu_custom_call.1} parent=1 // pred_check
      _
    $region7: #{tpu_custom_call.1} parent=1 // pred_check_branch
      %19 = sbr.rel (0) target = $region9
    $region8: #{tpu_custom_call.1} parent=1 // pred_region
      %20 = dma.done [#allocation3], 256
    $region9: #{tpu_custom_call.1} parent=1 // pred_fallthru
      _
    %v21 = vld [vmem:[#allocation2] sm:$0xff]
    %v22 = vld [vmem:[#allocation2 + $0x8] sm:$0xff]
    %23 = vst [vmem:[#allocation5] sm:$0xff] %v21
    %24 = vst [vmem:[#allocation5 + $0x8] sm:$0xff] %v22
    // Predicated region
    $region10: #{tpu_custom_call.1} parent=1 // pred_check
      _
    $region11: #{tpu_custom_call.1} parent=1 // pred_check_branch
      %26 = sbr.rel (0) target = $region13
    $region12: #{tpu_custom_call.1} parent=1 // pred_region
      %s28 = ssub.s32 256, 256
      %29 = vsyncadd [#allocation4], %s28
      %s31 = sshll.u32 [#allocation5], 4
      %s32 = int_to_ptr.vmem [resolvable:$true] %s31
      %34 = dma.vmem_to_hbm [thread:$0]  %s32, 256, %s1, [#allocation4]
    $region13: #{tpu_custom_call.1} parent=1 // pred_fallthru
      _
    // Predicated region
    $region14: #{tpu_custom_call.1} parent=1 // pred_check
      _
    $region15: #{tpu_custom_call.1} parent=1 // pred_check_branch
      %36 = sbr.rel (0) target = $region17
    $region16: #{tpu_custom_call.1} parent=1 // pred_region
      %37 = dma.done [#allocation4], 256
    $region17: #{tpu_custom_call.1} parent=1 // pred_fallthru
      _
    %38 = vsyncpa [#allocation3], 1
    %39 = vsyncpa [#allocation4], 1

</llo_original>
